<compile_context>
chip_gen: v7x
topology: tpu7x:2x2x1
jax: 0.10.0
libtpu: 0.0.40
codegen_flags: <defaults>
</compile_context>

<pallas_src>
import jax
import jax.numpy as jnp
from jax.experimental import pallas as pl
from jax.experimental.pallas import tpu as pltpu

# TODO(synk): the pretrained AutoModel backbone (and optional adapters) has no
# Pallas equivalent here; its `last_hidden_state` output is taken as an input.
# TODO(synk): Dropout is treated as identity (eval / p=0); training dropout
# would need pltpu.prng_* masking.
# TODO(synk): with a real backbone (H=768+), mark w/b/actual BlockSpecs with
# pipeline_mode=pl.Buffered(1) (grid-invariant across S) to reclaim VMEM.


def _round_up(x, m):
    return ((x + m - 1) // m) * m


def _pick_ts(S):
    """Sequence tile: full S when modest, else a lane-aligned divisor near 512."""
    if S <= 512:
        return S
    for cand in (512, 384, 256, 128):
        if S % cand == 0:
            return cand
    return S


def _pick_tb(B, ts, H, itemsize, budget):
    """Batch tile: largest aligned divisor that leaves >=2 batch tiles (v7x
    megacore) and keeps the double-buffered hidden tile inside `budget`."""
    row = 2 * ts * _round_up(H, 128) * itemsize          # 2x: double buffering
    for cand in (128, 64, 32, 16, 8):
        if cand < B and B % cand == 0 and cand * row <= budget:
            return cand
    return B                                             # single full-batch tile


def _head_kernel(hidden_ref, mask_ref, denom_ref, w_ref, b_ref, actual_ref,
                 out_ref, sqsum_ref, acc_ref):
    """Grid = (batch tiles, seq tiles); masked partial sums over S (MXU),
    head + loss partials on the last S step."""
    s_idx = pl.program_id(1)

    @pl.when(s_idx == 0)
    def _init():
        acc_ref[...] = jnp.zeros_like(acc_ref)

    # Masked sequence sum as a batched MXU contraction (same pattern as the
    # flash-attention p@V einsum): acc[b,0,h] += sum_s mask[b,0,s] * hidden[b,s,h]
    acc_ref[...] += jnp.einsum(
        'bqs,bsh->bqh', mask_ref[...], hidden_ref[...],
        preferred_element_type=jnp.float32)

    @pl.when(s_idx == pl.num_programs(1) - 1)
    def _finalize():
        # masked_mean -> fc(dropout(pooled)) -> squared-error partials.
        inv_d = 1.0 / denom_ref[...]                     # exact; once per batch tile
        pooled = acc_ref[...][:, 0, :] * inv_d           # (tb, H) f32
        out = jnp.dot(pooled, w_ref[...],
                      preferred_element_type=jnp.float32) + b_ref[...]
        out_ref[...] = out                               # (tb, O_pad), lane-dense
        diff = out - actual_ref[...]                     # padded lanes are exactly 0
        row_sq = jnp.sum(diff * diff, axis=1, keepdims=True)        # (tb, 1)
        sqsum_ref[...] = jnp.broadcast_to(row_sq, sqsum_ref.shape)  # (tb, 128)


def model_head_forward(hidden, mask, w, b, actual, *, tb=None, ts=None):
    """Returns (loss, out, actual), matching the torch module's Train output.

    hidden: [B, S, H] (bf16 or f32) = base(...)['last_hidden_state']
    mask:   [B, S]   attention mask (0/1)
    w:      [H, O]   fc weight (already transposed vs torch's [O, H])
    b:      [O]      fc bias
    actual: [B, O]   target embedding (batch['act_emb'])
    """
    B, S, H = hidden.shape
    O = w.shape[1]
    O_pad = _round_up(O, 128)
    hdt = hidden.dtype
    itemsize = jnp.dtype(hdt).itemsize

    # Generation-aware VMEM capacity (v7x has only 64 MiB / TC).
    try:
        vmem_cap = int(pltpu.get_tpu_info().vmem_capacity_bytes)
    except Exception:
        vmem_cap = 64 << 20

    if ts is None:
        ts = _pick_ts(S)
    if tb is None:
        tb = _pick_tb(B, ts, H, itemsize, budget=vmem_cap // 3)
    assert B % tb == 0 and S % ts == 0, "tile sizes must divide (B, S)"

    # Lane-dense padding of the tiny head tensors (zero columns contribute
    # exactly 0 to `out` and to the squared error).
    w_p = jnp.zeros((H, O_pad), jnp.float32).at[:, :O].set(w.astype(jnp.float32))
    b_p = jnp.zeros((1, O_pad), jnp.float32).at[0, :O].set(b.astype(jnp.float32))
    a_p = jnp.zeros((B, O_pad), jnp.float32).at[:, :O].set(actual.astype(jnp.float32))

    # Mask as (B, 1, S) in the hidden dtype (0/1 exact in bf16): lanes = S, no
    # 128x lane padding, MXU-ready.  Denominator precomputed once per row.
    mask3 = mask.astype(hdt).reshape(B, 1, S)
    denom = jnp.sum(mask.astype(jnp.float32), axis=1, keepdims=True)       # (B, 1)

    # VMEM estimate including (8,128) layout padding of every tile; inputs are
    # double-buffered by the BlockSpec pipeline.
    sub = max(8, 32 // itemsize)                                   # sublane pack
    hid_tile = tb * _round_up(ts, sub) * _round_up(H, 128) * itemsize
    msk_tile = tb * sub * _round_up(ts, 128) * itemsize            # (tb, 1, ts)
    den_tile = _round_up(tb, 8) * 128 * 4                          # (tb, 1)
    w_bytes = _round_up(H, 8) * O_pad * 4
    b_bytes = 8 * O_pad * 4
    act_bytes = _round_up(tb, 8) * O_pad * 4
    out_bytes = _round_up(tb, 8) * O_pad * 4
    sq_bytes = _round_up(tb, 8) * 128 * 4
    acc_bytes = tb * 8 * _round_up(H, 128) * 4                     # (tb, 1, H)
    est = (2 * (hid_tile + msk_tile + den_tile + w_bytes + b_bytes + act_bytes)
           + 2 * (out_bytes + sq_bytes) + acc_bytes)
    vmem_limit = int(est * 1.25) + (2 << 20)
    vmem_limit = max(vmem_limit, 32 << 20)
    vmem_limit = min(vmem_limit, (vmem_cap * 3) // 4)   # <=48 MiB on v7x

    out_p, sq_p = pl.pallas_call(
        _head_kernel,
        out_shape=(
            jax.ShapeDtypeStruct((B, O_pad), jnp.float32),   # out (padded)
            jax.ShapeDtypeStruct((B, 128), jnp.float32),     # per-row sq-error sums
        ),
        grid_spec=pltpu.PrefetchScalarGridSpec(
            num_scalar_prefetch=0,
            grid=(B // tb, S // ts),                       # reduction axis (S) last
            in_specs=[
                pl.BlockSpec((tb, ts, H), lambda bi, si: (bi, si, 0)),   # hidden
                pl.BlockSpec((tb, 1, ts), lambda bi, si: (bi, 0, si)),   # mask
                pl.BlockSpec((tb, 1), lambda bi, si: (bi, 0)),           # denom
                pl.BlockSpec((H, O_pad), lambda bi, si: (0, 0)),         # w
                pl.BlockSpec((1, O_pad), lambda bi, si: (0, 0)),         # b
                pl.BlockSpec((tb, O_pad), lambda bi, si: (bi, 0)),       # actual
            ],
            out_specs=(
                pl.BlockSpec((tb, O_pad), lambda bi, si: (bi, 0)),       # out
                pl.BlockSpec((tb, 128), lambda bi, si: (bi, 0)),         # sq sums
            ),
            scratch_shapes=[
                pltpu.VMEM((tb, 1, H), jnp.float32),   # masked-sum accumulator
            ],
        ),
        compiler_params=pltpu.CompilerParams(
            dimension_semantics=("parallel", "arbitrary"),   # batch || across TCs
            vmem_limit_bytes=vmem_limit,
        ),
    )(hidden, mask3, denom, w_p, b_p, a_p)

    out = out_p[:, :O]
    # MSELoss(reduction='mean'): padded lanes are exactly zero, divide by B*O.
    loss = jnp.sum(sq_p[:, 0]) * (1.0 / (B * O))
    return loss, out, actual


def _reference(hidden_f32, mask, w, b, actual):
    masked = hidden_f32 * mask[:, :, None]
    pooled = masked.sum(axis=1) / mask.sum(axis=1, keepdims=True)
    out = pooled @ w + b
    loss = jnp.mean((out - actual) ** 2)
    return loss, out


if __name__ == "__main__":
    # Small shapes consistent with the forward pass; the auto-tiler picks
    # tb=8 (2 batch tiles -> v7x megacore) and ts=S (full-sequence tile).
    B, S, H, O = 16, 64, 128, 16     # batch, seq, hidden_size, output_size

    key = jax.random.PRNGKey(0)
    k_hidden, k_w, k_b, k_act, k_len = jax.random.split(key, 5)

    # Stand-in for base(input_ids, attention_mask)['last_hidden_state'], bf16.
    hidden = jax.random.normal(k_hidden, (B, S, H),
                               dtype=jnp.float32).astype(jnp.bfloat16)

    # Attention mask: first `len` positions valid per example (len >= S//2 > 0).
    lens = jax.random.randint(k_len, (B,), S // 2, S + 1)
    mask = (jnp.arange(S)[None, :] < lens[:, None]).astype(jnp.float32)  # [B, S]

    # fc parameters (torch.nn.Linear(hidden_size, output_size)), stored [H, O].
    w = jax.random.normal(k_w, (H, O), dtype=jnp.float32) * 0.05
    b = jax.random.normal(k_b, (O,), dtype=jnp.float32) * 0.05

    # Target embedding batch['act_emb'].
    actual = jax.random.normal(k_act, (B, O), dtype=jnp.float32)

    loss, out, act = model_head_forward(hidden, mask, w, b, actual)
    jax.block_until_ready((loss, out, act))

    # Correctness check against a pure-JAX reference on the same bf16 input.
    ref_loss, ref_out = _reference(hidden.astype(jnp.float32), mask, w, b, actual)
    assert out.shape == (B, O) and act.shape == (B, O)
    assert jnp.allclose(out, ref_out, atol=2e-3, rtol=2e-3), "out mismatch"
    assert jnp.allclose(loss, ref_loss, atol=2e-3, rtol=2e-3), "loss mismatch"

    print("KERNEL_OK")
</pallas_src>

<mosaic_0001>
module attributes {stable_mosaic.version = 11 : i64} {
  func.func @_head_kernel(%arg0: i32, %arg1: i32, %arg2: memref<8x64x128xbf16, #tpu.memory_space<vmem>>, %arg3: memref<8x1x64xbf16, #tpu.memory_space<vmem>>, %arg4: memref<8x1xf32, #tpu.memory_space<vmem>>, %arg5: memref<128x128xf32, #tpu.memory_space<vmem>>, %arg6: memref<1x128xf32, #tpu.memory_space<vmem>>, %arg7: memref<8x128xf32, #tpu.memory_space<vmem>>, %arg8: memref<8x128xf32, #tpu.memory_space<vmem>>, %arg9: memref<8x128xf32, #tpu.memory_space<vmem>>, %arg10: memref<8x1x128xf32, #tpu.memory_space<vmem>>) attributes {dimension_semantics = [#tpu.dimension_semantics<parallel>, #tpu.dimension_semantics<arbitrary>], iteration_bounds = array<i64: 2, 1>, scalar_prefetch = 0 : i64, scratch_operands = 1 : i64, tpu.core_type = #tpu.core_type<tc>, window_params = [{transform_indices = @transform_0, window_bounds = array<i64: 8, 64, 128>}, {transform_indices = @transform_1, window_bounds = array<i64: 8, 1, 64>}, {transform_indices = @transform_2, window_bounds = array<i64: 8, 1>}, {pipeline_mode = #tpu.pipeline_mode<synchronous>, transform_indices = @transform_3, window_bounds = array<i64: 128, 128>}, {pipeline_mode = #tpu.pipeline_mode<synchronous>, transform_indices = @transform_4, window_bounds = array<i64: 1, 128>}, {transform_indices = @transform_5, window_bounds = array<i64: 8, 128>}, {transform_indices = @transform_6, window_bounds = array<i64: 8, 128>}, {transform_indices = @transform_7, window_bounds = array<i64: 8, 128>}]} {
    %c0_i32 = arith.constant 0 : i32
    %0 = arith.cmpi eq, %arg1, %c0_i32 : i32
    %1 = arith.extui %0 : i1 to i32
    %c0_i32_0 = arith.constant 0 : i32
    %2 = arith.cmpi ne, %1, %c0_i32_0 : i32
    scf.if %2 {
      %cst_14 = arith.constant 0.000000e+00 : f32
      %12 = vector.broadcast %cst_14 : f32 to vector<8x1x128xf32>
      %c0_15 = arith.constant 0 : index
      %c0_16 = arith.constant 0 : index
      %c0_17 = arith.constant 0 : index
      %13 = vector.load %arg10[%c0_15, %c0_16, %c0_17] : memref<8x1x128xf32, #tpu.memory_space<vmem>>, vector<8x1x128xf32>
      tpu.vector_store %arg10[%c0_15, %c0_16, %c0_17], %12 {strides = array<i32>} : memref<8x1x128xf32, #tpu.memory_space<vmem>>, vector<8x1x128xf32>,
    } else {
    }
    %c0 = arith.constant 0 : index
    %c0_1 = arith.constant 0 : index
    %c0_2 = arith.constant 0 : index
    %3 = vector.load %arg10[%c0, %c0_1, %c0_2] : memref<8x1x128xf32, #tpu.memory_space<vmem>>, vector<8x1x128xf32>
    %c0_3 = arith.constant 0 : index
    %c0_4 = arith.constant 0 : index
    %c0_5 = arith.constant 0 : index
    %4 = vector.load %arg3[%c0_3, %c0_4, %c0_5] : memref<8x1x64xbf16, #tpu.memory_space<vmem>>, vector<8x1x64xbf16>
    %c0_6 = arith.constant 0 : index
    %c0_7 = arith.constant 0 : index
    %c0_8 = arith.constant 0 : index
    %5 = vector.load %arg2[%c0_6, %c0_7, %c0_8] : memref<8x64x128xbf16, #tpu.memory_space<vmem>>, vector<8x64x128xbf16>
    "tpu.trace_start"() <{level = 10 : i32, message = "bqs,bsh->bqh"}> : () -> ()
    %cst = arith.constant dense<0.000000e+00> : vector<8x1x128xf32>
    %6 = tpu.matmul %4, %5, %cst {dimension_numbers = #tpu.dot_dimension_numbers<[2], [1], [1], [2], [0, 0, 0, 1, 1, 2], [0], [0]>} : vector<8x1x64xbf16>, vector<8x64x128xbf16>, vector<8x1x128xf32> -> vector<8x1x128xf32>
    "tpu.trace_stop"() : () -> ()
    %7 = arith.addf %3, %6 : vector<8x1x128xf32>
    %c0_9 = arith.constant 0 : index
    %c0_10 = arith.constant 0 : index
    %c0_11 = arith.constant 0 : index
    %8 = vector.load %arg10[%c0_9, %c0_10, %c0_11] : memref<8x1x128xf32, #tpu.memory_space<vmem>>, vector<8x1x128xf32>
    tpu.vector_store %arg10[%c0_9, %c0_10, %c0_11], %7 {strides = array<i32>} : memref<8x1x128xf32, #tpu.memory_space<vmem>>, vector<8x1x128xf32>,
    %c0_i32_12 = arith.constant 0 : i32
    %9 = arith.cmpi eq, %arg1, %c0_i32_12 : i32
    %10 = arith.extui %9 : i1 to i32
    %c0_i32_13 = arith.constant 0 : i32
    %11 = arith.cmpi ne, %10, %c0_i32_13 : i32
    scf.if %11 {
      %c0_14 = arith.constant 0 : index
      %c0_15 = arith.constant 0 : index
      %12 = vector.load %arg4[%c0_14, %c0_15] : memref<8x1xf32, #tpu.memory_space<vmem>>, vector<8x1xf32>
      %cst_16 = arith.constant 1.000000e+00 : f32
      %13 = vector.broadcast %cst_16 : f32 to vector<8x1xf32>
      %14 = arith.divf %13, %12 : vector<8x1xf32>
      %c0_17 = arith.constant 0 : index
      %c0_18 = arith.constant 0 : index
      %c0_19 = arith.constant 0 : index
      %15 = vector.load %arg10[%c0_17, %c0_18, %c0_19] : memref<8x1x128xf32, #tpu.memory_space<vmem>>, vector<8x1x128xf32>
      %16 = vector.shape_cast %15 : vector<8x1x128xf32> to vector<8x128xf32>
      %17 = vector.broadcast %14 : vector<8x1xf32> to vector<8x128xf32>
      %18 = arith.mulf %16, %17 : vector<8x128xf32>
      %c0_20 = arith.constant 0 : index
      %c0_21 = arith.constant 0 : index
      %19 = vector.load %arg5[%c0_20, %c0_21] : memref<128x128xf32, #tpu.memory_space<vmem>>, vector<128x128xf32>
      %cst_22 = arith.constant dense<0.000000e+00> : vector<8x128xf32>
      %20 = tpu.matmul %18, %19, %cst_22 {dimension_numbers = #tpu.dot_dimension_numbers<[1], [0], [0], [1], [0, 0, 1, 1], [], []>} : vector<8x128xf32>, vector<128x128xf32>, vector<8x128xf32> -> vector<8x128xf32>
      %c0_23 = arith.constant 0 : index
      %c0_24 = arith.constant 0 : index
      %21 = vector.load %arg6[%c0_23, %c0_24] : memref<1x128xf32, #tpu.memory_space<vmem>>, vector<1x128xf32>
      %22 = vector.broadcast %21 : vector<1x128xf32> to vector<8x128xf32>
      %23 = arith.addf %20, %22 : vector<8x128xf32>
      %c0_25 = arith.constant 0 : index
      %c0_26 = arith.constant 0 : index
      %24 = vector.load %arg8[%c0_25, %c0_26] : memref<8x128xf32, #tpu.memory_space<vmem>>, vector<8x128xf32>
      tpu.vector_store %arg8[%c0_25, %c0_26], %23 {strides = array<i32>} : memref<8x128xf32, #tpu.memory_space<vmem>>, vector<8x128xf32>,
      %c0_27 = arith.constant 0 : index
      %c0_28 = arith.constant 0 : index
      %25 = vector.load %arg7[%c0_27, %c0_28] : memref<8x128xf32, #tpu.memory_space<vmem>>, vector<8x128xf32>
      %26 = arith.subf %23, %25 : vector<8x128xf32>
      %27 = arith.mulf %26, %26 : vector<8x128xf32>
      %cst_29 = arith.constant dense<0.000000e+00> : vector<8xf32>
      %28 = vector.multi_reduction <add>, %27, %cst_29 [1] : vector<8x128xf32> to vector<8xf32>
      %29 = vector.shape_cast %28 : vector<8xf32> to vector<8x1xf32>
      %30 = vector.shape_cast %29 : vector<8x1xf32> to vector<8x1xf32>
      %31 = vector.broadcast %30 : vector<8x1xf32> to vector<8x128xf32>
      %c0_30 = arith.constant 0 : index
      %c0_31 = arith.constant 0 : index
      %32 = vector.load %arg9[%c0_30, %c0_31] : memref<8x128xf32, #tpu.memory_space<vmem>>, vector<8x128xf32>
      tpu.vector_store %arg9[%c0_30, %c0_31], %31 {strides = array<i32>} : memref<8x128xf32, #tpu.memory_space<vmem>>, vector<8x128xf32>,
    } else {
    }
    return
  }
  func.func @transform_0(%arg0: i32, %arg1: i32) -> (i32, i32, i32) {
    %c0_i32 = arith.constant 0 : i32
    %c0_i32_0 = arith.constant 0 : i32
    return %arg0, %arg1, %c0_i32 : i32, i32, i32
  }
  func.func @transform_1(%arg0: i32, %arg1: i32) -> (i32, i32, i32) {
    %c0_i32 = arith.constant 0 : i32
    %c0_i32_0 = arith.constant 0 : i32
    return %arg0, %c0_i32, %arg1 : i32, i32, i32
  }
  func.func @transform_2(%arg0: i32, %arg1: i32) -> (i32, i32) {
    %c0_i32 = arith.constant 0 : i32
    %c0_i32_0 = arith.constant 0 : i32
    return %arg0, %c0_i32 : i32, i32
  }
  func.func @transform_3(%arg0: i32, %arg1: i32) -> (i32, i32) {
    %c0_i32 = arith.constant 0 : i32
    %c0_i32_0 = arith.constant 0 : i32
    %c0_i32_1 = arith.constant 0 : i32
    return %c0_i32, %c0_i32_0 : i32, i32
  }
  func.func @transform_4(%arg0: i32, %arg1: i32) -> (i32, i32) {
    %c0_i32 = arith.constant 0 : i32
    %c0_i32_0 = arith.constant 0 : i32
    %c0_i32_1 = arith.constant 0 : i32
    return %c0_i32, %c0_i32_0 : i32, i32
  }
  func.func @transform_5(%arg0: i32, %arg1: i32) -> (i32, i32) {
    %c0_i32 = arith.constant 0 : i32
    %c0_i32_0 = arith.constant 0 : i32
    return %arg0, %c0_i32 : i32, i32
  }
  func.func @transform_6(%arg0: i32, %arg1: i32) -> (i32, i32) {
    %c0_i32 = arith.constant 0 : i32
    %c0_i32_0 = arith.constant 0 : i32
    return %arg0, %c0_i32 : i32, i32
  }
  func.func @transform_7(%arg0: i32, %arg1: i32) -> (i32, i32) {
    %c0_i32 = arith.constant 0 : i32
    %c0_i32_0 = arith.constant 0 : i32
    return %arg0, %c0_i32 : i32, i32
  }
}

</mosaic_0001>

<llo_original>
// kernel: tpu_custom_call.1
$region0: #{tpu_custom_call.1}
  #allocation0 [shape = 'u32[]', space=smem, size = 0x4, offset = 0x4, fixed_abs, tag = 'smem constant byte address 0x4 - core index']
  #allocation1 [shape = 'u32[144,128]{1,0:T(1,128)}', space=vmem, size = 0x12000, scoped, tag = 'internal scratch']
  #allocation2 [shape = 'f32[8,1,128]{2,1,0:T(1,128)}', space=vmem, size = 0x1000, scoped, tag = 'scratch operand']
  %s0 = inlined_call_operand.hbm [shape: bf16[16,64,128], index: 0, kind: input, shape index: {}]
  %s1 = inlined_call_operand.vmem [shape: bf16[16,1,64], index: 1, kind: input, shape index: {}]
  %s2 = inlined_call_operand.vmem [shape: f32[16,1], index: 2, kind: input, shape index: {}]
  %s3 = inlined_call_operand.hbm [shape: f32[128,128], index: 3, kind: input, shape index: {}]
  %s4 = inlined_call_operand.vmem [shape: f32[1,128], index: 4, kind: input, shape index: {}]
  %s5 = inlined_call_operand.vmem [shape: f32[16,128], index: 5, kind: input, shape index: {}]
  %s6 = inlined_call_operand.hbm [shape: f32[16,128], index: 6, kind: output, shape index: {0}]
  %s7 = inlined_call_operand.hbm [shape: f32[16,128], index: 7, kind: output, shape index: {1}]
  %8 = xla_tuple %s6, %s7
  %s9 = sld [smem:[#allocation0]]
  $region81: #{tpu_custom_call.1} parent=0
    _
  %s11 = ssub.s32 1, %s9
  %s12 = scalar_select 0, %s11, %s9
  $region1: #{tpu_custom_call.1} parent=0
    #allocation3 [shape = 'u8[262144]{0}', space=vmem, size = 0x40000, scoped, tag = 'input window, operand 0']
    #allocation4 [shape = 's32[2]{0}', space=sflag, size = 0x8, scoped, tag = 'scoped memory for tpu_custom_call.1']
    #allocation5 [shape = 's32[2]{0}', space=sflag, size = 0x8, scoped, tag = 'scoped memory for tpu_custom_call.1']
    #allocation6 [shape = 'u8[65536]{0}', space=vmem, size = 0x10000, scoped, tag = 'input window, operand 3, single buffered']
    #allocation7 [shape = 's32[1]{0}', space=sflag, size = 0x4, scoped, tag = 'scoped memory for tpu_custom_call.1']
    #allocation8 [shape = 'u8[8192]{0}', space=vmem, size = 0x2000, scoped, tag = 'output window, operand 0']
    #allocation9 [shape = 'u8[8192]{0}', space=vmem, size = 0x2000, scoped, tag = 'output window, operand 1']
    #allocation10 [shape = 's32[2]{0}', space=sflag, size = 0x8, scoped, tag = 'scoped memory for tpu_custom_call.1']
    %13 = vsyncpa [#allocation4], 0
    %s14 = scalar_lea.sflag [#allocation4], 1
    %15 = vsyncpa %s14, 0
    %16 = vsyncpa [#allocation7], 0
    %17 = vsyncpa [#allocation5], 0
    %s18 = scalar_lea.sflag [#allocation5], 1
    %19 = vsyncpa %s18, 0
    %20 = vsyncpa [#allocation10], 0
    %s21 = scalar_lea.sflag [#allocation10], 1
    %22 = vsyncpa %s21, 0
    loop: start=0, step=1, limit=4
    $region2: #{tpu_custom_call.1} parent=1 // loop_pre_header
      _
    $region3: #{tpu_custom_call.1} parent=1 // loop_header
      %s24 = sphi 0, %s28
      %p25 = scmp.ge.s32.totalorder %s24, 4
      %s31 = sphi 0, %s43
      %s32 = sphi 0, %s39
      %s33 = sphi 0, %s31
      %s34 = sphi 0, %s32
      %s35 = sphi 0, %s33
      %s36 = sphi 0, %s34
      %s48 = sphi 0, %s50
      %s51 = sphi 0, %s48
      %s52 = sphi 0, %s51
      %s68 = sphi 0, %s52
      %s76 = sphi 0, %s78
      %s79 = sphi 0, %s76
      %s80 = sphi 0, %s79
      %s96 = sphi 0, %s80
      %s102 = sphi 0, %s104
      %s105 = sphi 0, %s102
      %s106 = sphi 0, %s105
      %s122 = sphi 0, %s106
      %s126 = sphi 0, %s126
      %s128 = sphi 0, %s126
      %s129 = sphi 0, %s128
      %s143 = sphi 0, %s129
      %s147 = sphi 0, %s147
      %s149 = sphi 0, %s147
      %s150 = sphi 0, %s149
      %s164 = sphi 0, %s150
      %s170 = sphi 0, %s172
      %s173 = sphi 0, %s170
      %s174 = sphi 0, %s173
      %s190 = sphi 0, %s174
      %s196 = sphi 0, %s198
      %s199 = sphi 0, %s196
      %s200 = sphi 0, %s199
      %s216 = sphi 0, %s200
      %s222 = sphi 0, %s224
      %s225 = sphi 0, %s222
      %s226 = sphi 0, %s225
      %s242 = sphi 0, %s226
    $region4: #{tpu_custom_call.1} parent=1 // loop_header_branch
      %27 = sbr.rel (%p25) target = $region8
    $region5: #{tpu_custom_call.1} parent=1 // loop_body
      %s29 = ssub.s32 %s24, 1
      %s30 = ssub.s32 %s24, 2
      %s37 = sadd.s32 1, %s32
      %p38 = scmp.ge.s32.totalorder %s37, 1
      %s39 = scalar_select %p38, 0, %s37
      %s40 = sadd.s32 1, %s31
      %s41 = scalar_select %p38, %s40, %s31
      %p42 = scmp.ge.s32.totalorder %s41, 2
      %s43 = scalar_select %p42, 0, %s41
      %s44 = ssub.s32 %s31, %s43
      %s45 = ssub.s32 %s32, %s39
      %s46 = sor.u32 %s44, %s45
      %p47 = scmp.eq.s32.totalorder %s46, 0
      %s49 = sadd.s32 %s48, 1
      %s50 = scalar_select %p47, %s48, %s49
      %p53 = pneg %p47
      %p54 = scmp.eq.s32.totalorder %s24, 1
      %p55 = por %p53, %p54
      %p56 = scmp.ne.s32.totalorder %s48, %s51
      %p57 = scmp.eq.s32.totalorder %s24, 0
      %p58 = por %p56, %p57
      %p59 = scmp.ne.s32.totalorder %s48, %s51
      %p60 = scmp.eq.s32.totalorder %s29, 1
      %p61 = por %p59, %p60
      %p62 = scmp.ne.s32.totalorder %s51, %s52
      %p63 = scmp.eq.s32.totalorder %s29, 0
      %p64 = por %p62, %p63
      %p65 = scmp.ne.s32.totalorder %s51, %s52
      %p66 = scmp.eq.s32.totalorder %s30, 1
      %p67 = por %p65, %p66
      %p69 = scmp.ne.s32.totalorder %s52, %s68
      %p70 = scmp.eq.s32.totalorder %s30, 0
      %p71 = por %p69, %p70
      %s72 = ssub.s32 %s31, %s43
      %s73 = ssub.s32 %s32, %s39
      %s74 = sor.u32 %s72, %s73
      %p75 = scmp.eq.s32.totalorder %s74, 0
      %s77 = sadd.s32 %s76, 1
      %s78 = scalar_select %p75, %s76, %s77
      %p81 = pneg %p75
      %p82 = scmp.eq.s32.totalorder %s24, 1
      %p83 = por %p81, %p82
      %p84 = scmp.ne.s32.totalorder %s76, %s79
      %p85 = scmp.eq.s32.totalorder %s24, 0
      %p86 = por %p84, %p85
      %p87 = scmp.ne.s32.totalorder %s76, %s79
      %p88 = scmp.eq.s32.totalorder %s29, 1
      %p89 = por %p87, %p88
      %p90 = scmp.ne.s32.totalorder %s79, %s80
      %p91 = scmp.eq.s32.totalorder %s29, 0
      %p92 = por %p90, %p91
      %p93 = scmp.ne.s32.totalorder %s79, %s80
      %p94 = scmp.eq.s32.totalorder %s30, 1
      %p95 = por %p93, %p94
      %p97 = scmp.ne.s32.totalorder %s80, %s96
      %p98 = scmp.eq.s32.totalorder %s30, 0
      %p99 = por %p97, %p98
      %s100 = ssub.s32 %s31, %s43
      %p101 = scmp.eq.s32.totalorder %s100, 0
      %s103 = sadd.s32 %s102, 1
      %s104 = scalar_select %p101, %s102, %s103
      %p107 = pneg %p101
      %p108 = scmp.eq.s32.totalorder %s24, 1
      %p109 = por %p107, %p108
      %p110 = scmp.ne.s32.totalorder %s102, %s105
      %p111 = scmp.eq.s32.totalorder %s24, 0
      %p112 = por %p110, %p111
      %p113 = scmp.ne.s32.totalorder %s102, %s105
      %p114 = scmp.eq.s32.totalorder %s29, 1
      %p115 = por %p113, %p114
      %p116 = scmp.ne.s32.totalorder %s105, %s106
      %p117 = scmp.eq.s32.totalorder %s29, 0
      %p118 = por %p116, %p117
      %p119 = scmp.ne.s32.totalorder %s105, %s106
      %p120 = scmp.eq.s32.totalorder %s30, 1
      %p121 = por %p119, %p120
      %p123 = scmp.ne.s32.totalorder %s106, %s122
      %p124 = scmp.eq.s32.totalorder %s30, 0
      %p125 = por %p123, %p124
      %s127 = sadd.s32 %s126, 1
      %p130 = scmp.eq.s32.totalorder %s24, 1
      %p131 = scmp.ne.s32.totalorder %s126, %s128
      %p132 = scmp.eq.s32.totalorder %s24, 0
      %p133 = por %p131, %p132
      %p134 = scmp.ne.s32.totalorder %s126, %s128
      %p135 = scmp.eq.s32.totalorder %s29, 1
      %p136 = por %p134, %p135
      %p137 = scmp.ne.s32.totalorder %s128, %s129
      %p138 = scmp.eq.s32.totalorder %s29, 0
      %p139 = por %p137, %p138
      %p140 = scmp.ne.s32.totalorder %s128, %s129
      %p141 = scmp.eq.s32.totalorder %s30, 1
      %p142 = por %p140, %p141
      %p144 = scmp.ne.s32.totalorder %s129, %s143
      %p145 = scmp.eq.s32.totalorder %s30, 0
      %p146 = por %p144, %p145
      %s148 = sadd.s32 %s147, 1
      %p151 = scmp.eq.s32.totalorder %s24, 1
      %p152 = scmp.ne.s32.totalorder %s147, %s149
      %p153 = scmp.eq.s32.totalorder %s24, 0
      %p154 = por %p152, %p153
      %p155 = scmp.ne.s32.totalorder %s147, %s149
      %p156 = scmp.eq.s32.totalorder %s29, 1
      %p157 = por %p155, %p156
      %p158 = scmp.ne.s32.totalorder %s149, %s150
      %p159 = scmp.eq.s32.totalorder %s29, 0
      %p160 = por %p158, %p159
      %p161 = scmp.ne.s32.totalorder %s149, %s150
      %p162 = scmp.eq.s32.totalorder %s30, 1
      %p163 = por %p161, %p162
      %p165 = scmp.ne.s32.totalorder %s150, %s164
      %p166 = scmp.eq.s32.totalorder %s30, 0
      %p167 = por %p165, %p166
      %s168 = ssub.s32 %s31, %s43
      %p169 = scmp.eq.s32.totalorder %s168, 0
      %s171 = sadd.s32 %s170, 1
      %s172 = scalar_select %p169, %s170, %s171
      %p175 = pneg %p169
      %p176 = scmp.eq.s32.totalorder %s24, 1
      %p177 = por %p175, %p176
      %p178 = scmp.ne.s32.totalorder %s170, %s173
      %p179 = scmp.eq.s32.totalorder %s24, 0
      %p180 = por %p178, %p179
      %p181 = scmp.ne.s32.totalorder %s170, %s173
      %p182 = scmp.eq.s32.totalorder %s29, 1
      %p183 = por %p181, %p182
      %p184 = scmp.ne.s32.totalorder %s173, %s174
      %p185 = scmp.eq.s32.totalorder %s29, 0
      %p186 = por %p184, %p185
      %p187 = scmp.ne.s32.totalorder %s173, %s174
      %p188 = scmp.eq.s32.totalorder %s30, 1
      %p189 = por %p187, %p188
      %p191 = scmp.ne.s32.totalorder %s174, %s190
      %p192 = scmp.eq.s32.totalorder %s30, 0
      %p193 = por %p191, %p192
      %s194 = ssub.s32 %s31, %s43
      %p195 = scmp.eq.s32.totalorder %s194, 0
      %s197 = sadd.s32 %s196, 1
      %s198 = scalar_select %p195, %s196, %s197
      %p201 = pneg %p195
      %p202 = scmp.eq.s32.totalorder %s24, 1
      %p203 = por %p201, %p202
      %p204 = scmp.ne.s32.totalorder %s196, %s199
      %p205 = scmp.eq.s32.totalorder %s24, 0
      %p206 = por %p204, %p205
      %p207 = scmp.ne.s32.totalorder %s196, %s199
      %p208 = scmp.eq.s32.totalorder %s29, 1
      %p209 = por %p207, %p208
      %p210 = scmp.ne.s32.totalorder %s199, %s200
      %p211 = scmp.eq.s32.totalorder %s29, 0
      %p212 = por %p210, %p211
      %p213 = scmp.ne.s32.totalorder %s199, %s200
      %p214 = scmp.eq.s32.totalorder %s30, 1
      %p215 = por %p213, %p214
      %p217 = scmp.ne.s32.totalorder %s200, %s216
      %p218 = scmp.eq.s32.totalorder %s30, 0
      %p219 = por %p217, %p218
      %s220 = ssub.s32 %s31, %s43
      %p221 = scmp.eq.s32.totalorder %s220, 0
      %s223 = sadd.s32 %s222, 1
      %s224 = scalar_select %p221, %s222, %s223
      %p227 = pneg %p221
      %p228 = scmp.eq.s32.totalorder %s24, 1
      %p229 = por %p227, %p228
      %p230 = scmp.ne.s32.totalorder %s222, %s225
      %p231 = scmp.eq.s32.totalorder %s24, 0
      %p232 = por %p230, %p231
      %p233 = scmp.ne.s32.totalorder %s222, %s225
      %p234 = scmp.eq.s32.totalorder %s29, 1
      %p235 = por %p233, %p234
      %p236 = scmp.ne.s32.totalorder %s225, %s226
      %p237 = scmp.eq.s32.totalorder %s29, 0
      %p238 = por %p236, %p237
      %p239 = scmp.ne.s32.totalorder %s225, %s226
      %p240 = scmp.eq.s32.totalorder %s30, 1
      %p241 = por %p239, %p240
      %p243 = scmp.ne.s32.totalorder %s226, %s242
      %p244 = scmp.eq.s32.totalorder %s30, 0
      %p245 = por %p243, %p244
      %p246 = scmp.le.s32.totalorder 1, %s24
      %p247 = scmp.lt.s32.totalorder %s24, 3
      %p248 = pnand %p246, %p247
      %p249 = pneg %p248
      // Predicated region
      $region9: #{tpu_custom_call.1} parent=5 // pred_check
        _
      $region10: #{tpu_custom_call.1} parent=5 // pred_check_branch
        %251 = sbr.rel (%p248) target = $region12
      $region11: #{tpu_custom_call.1} parent=5 // pred_region
        %s252 = ssub.s32 %s24, 1
        // Predicated region
        $region13: #{tpu_custom_call.1} parent=11 // pred_check
          %p253 = pneg %p139
        $region14: #{tpu_custom_call.1} parent=11 // pred_check_branch
          %255 = sbr.rel (%p253) target = $region16
        $region15: #{tpu_custom_call.1} parent=11 // pred_region
          %s257 = ssub.s32 2048, 2048
          %258 = vsyncadd [#allocation7], %s257
          %s259 = sshll.u32 [#allocation6], 4
          %s260 = int_to_ptr.vmem [resolvable:$true] %s259
          %265 = dma.hbm_to_vmem [thread:$0]  %s3, 2048, %s260, [#allocation7], 128, 128, 8
        $region16: #{tpu_custom_call.1} parent=11 // pred_fallthru
          _
        // Predicated region
        $region17: #{tpu_custom_call.1} parent=11 // pred_check
          %p266 = pneg %p160
        $region18: #{tpu_custom_call.1} parent=11 // pred_check_branch
          %268 = sbr.rel (%p266) target = $region20
        $region19: #{tpu_custom_call.1} parent=11 // pred_region
          _
        $region20: #{tpu_custom_call.1} parent=11 // pred_fallthru
          _
      $region12: #{tpu_custom_call.1} parent=5 // pred_fallthru
        _
      %p269 = scmp.lt.s32.totalorder %s24, 2
      // Predicated region
      $region21: #{tpu_custom_call.1} parent=5 // pred_check
        %p270 = pneg %p269
      $region22: #{tpu_custom_call.1} parent=5 // pred_check_branch
        %272 = sbr.rel (%p270) target = $region24
      $region23: #{tpu_custom_call.1} parent=5 // pred_region
        // Predicated region
        $region25: #{tpu_custom_call.1} parent=23 // pred_check
          %p273 = pneg %p58
        $region26: #{tpu_custom_call.1} parent=23 // pred_check_branch
          %275 = sbr.rel (%p273) target = $region28
        $region27: #{tpu_custom_call.1} parent=23 // pred_region
          %s276 = sand.u32 %s48, 1
          %s277 = scalar_lea.sflag [#allocation4], %s276
          %s278 = sand.u32 %s48, 1
          %s279 = smul.addr %s278, 256
          %s280 = scalar_lea.vmem [#allocation3], %s279
          %s281 = smul.u32 8, %s31
          %s282 = smul.u32 8, %s32
          %s284 = ssub.s32 4096, 4096
          %285 = vsyncadd %s277, %s284
          %s286 = smul.addr %s281, 8
          %s287 = sadd.s32 %s282, %s286
          %s288 = smul.addr %s287, 64
          %s289 = scalar_lea.hbm %s0, %s288
          %s290 = sshll.u32 %s280, 4
          %s291 = int_to_ptr.vmem [resolvable:$true] %s290
          %296 = dma.hbm_to_vmem [thread:$0]  %s289, 4096, %s291, %s277, 64, 64, 4
        $region28: #{tpu_custom_call.1} parent=23 // pred_fallthru
          _
        // Predicated region
        $region29: #{tpu_custom_call.1} parent=23 // pred_check
          %p297 = pneg %p86
        $region30: #{tpu_custom_call.1} parent=23 // pred_check_branch
          %299 = sbr.rel (%p297) target = $region32
        $region31: #{tpu_custom_call.1} parent=23 // pred_region
          %s300 = smul.u32 8, %s31
          %p301 = scmp.lt.s32.totalorder %s300, 15
          %s302 = scalar_select %p301, %s300, 15
          %p303 = scmp.lt.s32.totalorder %s32, 0
          %s304 = scalar_select %p303, %s32, 0
          %s305 = sadd.s32 %s304, %s302
          %s306 = scalar_lea.vmem %s1, %s305
          %s307 = smul.u32 8, %s31
        $region32: #{tpu_custom_call.1} parent=23 // pred_fallthru
          _
        // Predicated region
        $region33: #{tpu_custom_call.1} parent=23 // pred_check
          %p308 = pneg %p112
        $region34: #{tpu_custom_call.1} parent=23 // pred_check_branch
          %310 = sbr.rel (%p308) target = $region36
        $region35: #{tpu_custom_call.1} parent=23 // pred_region
          %p311 = scmp.lt.s32.totalorder %s31, 1
          %s312 = scalar_select %p311, %s31, 1
          %s313 = smul.addr %s312, 8
          %s314 = scalar_lea.vmem %s2, %s313
        $region36: #{tpu_custom_call.1} parent=23 // pred_fallthru
          _
        // Predicated region
        $region37: #{tpu_custom_call.1} parent=23 // pred_check
          %p315 = pneg %p180
        $region38: #{tpu_custom_call.1} parent=23 // pred_check_branch
          %317 = sbr.rel (%p315) target = $region40
        $region39: #{tpu_custom_call.1} parent=23 // pred_region
          %p318 = scmp.lt.s32.totalorder %s31, 1
          %s319 = scalar_select %p318, %s31, 1
          %s320 = smul.addr %s319, 8
          %s321 = scalar_lea.vmem %s5, %s320
        $region40: #{tpu_custom_call.1} parent=23 // pred_fallthru
          _
      $region24: #{tpu_custom_call.1} parent=5 // pred_fallthru
        _
      %p322 = scmp.le.s32.totalorder 1, %s24
      %p323 = scmp.lt.s32.totalorder %s24, 3
      %p324 = pnand %p322, %p323
      %p325 = pneg %p324
      // Predicated region
      $region41: #{tpu_custom_call.1} parent=5 // pred_check
        _
      $region42: #{tpu_custom_call.1} parent=5 // pred_check_branch
        %327 = sbr.rel (%p324) target = $region44
      $region43: #{tpu_custom_call.1} parent=5 // pred_region
        %s328 = ssub.s32 %s24, 1
        %s329 = sand.u32 %s51, 1
        %s330 = scalar_lea.sflag [#allocation4], %s329
        %s331 = sand.u32 %s51, 1
        %s332 = smul.addr %s331, 256
        %s333 = scalar_lea.vmem [#allocation3], %s332
        // Predicated region
        $region45: #{tpu_custom_call.1} parent=43 // pred_check
          %p334 = pneg %p64
        $region46: #{tpu_custom_call.1} parent=43 // pred_check_branch
          %336 = sbr.rel (%p334) target = $region48
        $region47: #{tpu_custom_call.1} parent=43 // pred_region
          %337 = dma.done %s330, 4096
        $region48: #{tpu_custom_call.1} parent=43 // pred_fallthru
          _
        // Predicated region
        $region49: #{tpu_custom_call.1} parent=43 // pred_check
          %p338 = pneg %p139
        $region50: #{tpu_custom_call.1} parent=43 // pred_check_branch
          %340 = sbr.rel (%p338) target = $region52
        $region51: #{tpu_custom_call.1} parent=43 // pred_region
          %341 = dma.done [#allocation7], 2048
        $region52: #{tpu_custom_call.1} parent=43 // pred_fallthru
          _
        %s342 = sand.u32 %s51, 1
        %s343 = scalar_lea.sflag [#allocation4], %s342
        %s344 = sand.u32 %s51, 1
        %s345 = smul.addr %s344, 256
        %s346 = scalar_lea.vmem [#allocation3], %s345
        %p347 = pneg %p64
        %p348 = pneg %p61
        %s349 = smul.u32 8, %s33
        %p350 = scmp.lt.s32.totalorder %s349, 15
        %s351 = scalar_select %p350, %s349, 15
        %p352 = scmp.lt.s32.totalorder %s34, 0
        %s353 = scalar_select %p352, %s34, 0
        %s354 = sadd.s32 %s353, %s351
        %s355 = scalar_lea.vmem %s1, %s354
        %p356 = pneg %p92
        %p357 = pneg %p89
        %p358 = scmp.lt.s32.totalorder %s33, 1
        %s359 = scalar_select %p358, %s33, 1
        %s360 = smul.addr %s359, 8
        %s361 = scalar_lea.vmem %s2, %s360
        %p362 = pneg %p118
        %p363 = pneg %p115
        %p364 = pneg %p139
        %p365 = pneg %p136
        %p366 = pneg %p160
        %p367 = pneg %p157
        %p368 = scmp.lt.s32.totalorder %s33, 1
        %s369 = scalar_select %p368, %s33, 1
        %s370 = smul.addr %s369, 8
        %s371 = scalar_lea.vmem %s5, %s370
        %p372 = pneg %p186
        %p373 = pneg %p183
        %p374 = pneg %p212
        %p375 = pneg %p209
        %s376 = sand.u32 %s199, 1
        %s377 = scalar_lea.sflag [#allocation5], %s376
        %s378 = sand.u32 %s199, 1
        %s379 = smul.addr %s378, 8
        %s380 = scalar_lea.vmem [#allocation8], %s379
        %p381 = pneg %p238
        %p382 = pneg %p235
        %s383 = sand.u32 %s225, 1
        %s384 = scalar_lea.sflag [#allocation10], %s383
        %s385 = sand.u32 %s225, 1
        %s386 = smul.addr %s385, 8
        %s387 = scalar_lea.vmem [#allocation9], %s386
        %s388 = smul.u32 8, %s33
        %s389 = smul.u32 8, %s34
        %s390 = smul.u32 8, %s33
        %p391 = scmp.lt.s32.totalorder %s390, 15
        %s392 = scalar_select %p391, %s390, 15
        %p393 = scmp.lt.s32.totalorder %s34, 0
        %s394 = scalar_select %p393, %s34, 0
        %s395 = sadd.s32 %s394, %s392
        %s396 = scalar_lea.vmem %s1, %s395
        %s397 = smul.u32 8, %s33
        %p398 = scmp.lt.s32.totalorder %s33, 1
        %s399 = scalar_select %p398, %s33, 1
        %s400 = smul.addr %s399, 8
        %s401 = scalar_lea.vmem %s2, %s400
        %p402 = scmp.lt.s32.totalorder %s33, 1
        %s403 = scalar_select %p402, %s33, 1
        %s404 = smul.addr %s403, 8
        %s405 = scalar_lea.vmem %s5, %s404
        %p407 = scmp.eq.s32.totalorder %s34, 0
        // Predicated region
        $region53: #{tpu_custom_call.1} parent=43 // pred_check
          %p408 = pneg %p407
        $region54: #{tpu_custom_call.1} parent=43 // pred_check_branch
          %410 = sbr.rel (%p408) target = $region56
        $region55: #{tpu_custom_call.1} parent=43 // pred_region
          %411 = vst [vmem:[#allocation2] sm:$0x1] 0.0
          %412 = vst [vmem:[#allocation2 + $0x1] sm:$0x1] 0.0
          %413 = vst [vmem:[#allocation2 + $0x2] sm:$0x1] 0.0
          %414 = vst [vmem:[#allocation2 + $0x3] sm:$0x1] 0.0
          %415 = vst [vmem:[#allocation2 + $0x4] sm:$0x1] 0.0
          %416 = vst [vmem:[#allocation2 + $0x5] sm:$0x1] 0.0
          %417 = vst [vmem:[#allocation2 + $0x6] sm:$0x1] 0.0
          %418 = vst [vmem:[#allocation2 + $0x7] sm:$0x1] 0.0
        $region56: #{tpu_custom_call.1} parent=43 // pred_fallthru
          _
        %v419 = vld [vmem:[#allocation2] sm:$0x1]
        %v420 = vld [vmem:[#allocation2 + $0x1] sm:$0x1]
        %v421 = vld [vmem:[#allocation2 + $0x2] sm:$0x1]
        %v422 = vld [vmem:[#allocation2 + $0x3] sm:$0x1]
        %v423 = vld [vmem:[#allocation2 + $0x4] sm:$0x1]
        %v424 = vld [vmem:[#allocation2 + $0x5] sm:$0x1]
        %v425 = vld [vmem:[#allocation2 + $0x6] sm:$0x1]
        %v426 = vld [vmem:[#allocation2 + $0x7] sm:$0x1]
        %v427 = vld [vmem:[%s396] sm:$0x1]
        %v428 = vld [vmem:[%s396 + $0x1] sm:$0x1]
        %v429 = vld [vmem:[%s396 + $0x2] sm:$0x1]
        %v430 = vld [vmem:[%s396 + $0x3] sm:$0x1]
        %v431 = vld [vmem:[%s396 + $0x4] sm:$0x1]
        %v432 = vld [vmem:[%s396 + $0x5] sm:$0x1]
        %v433 = vld [vmem:[%s396 + $0x6] sm:$0x1]
        %v434 = vld [vmem:[%s396 + $0x7] sm:$0x1]
        %v435 = vld [vmem:[%s333] sm:$0xf]
        %v436 = vld [vmem:[%s333 + $0x4] sm:$0xf]
        %v437 = vld [vmem:[%s333 + $0x8] sm:$0xf]
        %v438 = vld [vmem:[%s333 + $0xc] sm:$0xf]
        %v439 = vld [vmem:[%s333 + $0x10] sm:$0xf]
        %v440 = vld [vmem:[%s333 + $0x14] sm:$0xf]
        %v441 = vld [vmem:[%s333 + $0x18] sm:$0xf]
        %v442 = vld [vmem:[%s333 + $0x1c] sm:$0xf]
        %v443 = vld [vmem:[%s333 + $0x20] sm:$0xf]
        %v444 = vld [vmem:[%s333 + $0x24] sm:$0xf]
        %v445 = vld [vmem:[%s333 + $0x28] sm:$0xf]
        %v446 = vld [vmem:[%s333 + $0x2c] sm:$0xf]
        %v447 = vld [vmem:[%s333 + $0x30] sm:$0xf]
        %v448 = vld [vmem:[%s333 + $0x34] sm:$0xf]
        %v449 = vld [vmem:[%s333 + $0x38] sm:$0xf]
        %v450 = vld [vmem:[%s333 + $0x3c] sm:$0xf]
        %v451 = vld [vmem:[%s333 + $0x40] sm:$0xf]
        %v452 = vld [vmem:[%s333 + $0x44] sm:$0xf]
        %v453 = vld [vmem:[%s333 + $0x48] sm:$0xf]
        %v454 = vld [vmem:[%s333 + $0x4c] sm:$0xf]
        %v455 = vld [vmem:[%s333 + $0x50] sm:$0xf]
        %v456 = vld [vmem:[%s333 + $0x54] sm:$0xf]
        %v457 = vld [vmem:[%s333 + $0x58] sm:$0xf]
        %v458 = vld [vmem:[%s333 + $0x5c] sm:$0xf]
        %v459 = vld [vmem:[%s333 + $0x60] sm:$0xf]
        %v460 = vld [vmem:[%s333 + $0x64] sm:$0xf]
        %v461 = vld [vmem:[%s333 + $0x68] sm:$0xf]
        %v462 = vld [vmem:[%s333 + $0x6c] sm:$0xf]
        %v463 = vld [vmem:[%s333 + $0x70] sm:$0xf]
        %v464 = vld [vmem:[%s333 + $0x74] sm:$0xf]
        %v465 = vld [vmem:[%s333 + $0x78] sm:$0xf]
        %v466 = vld [vmem:[%s333 + $0x7c] sm:$0xf]
        %v467 = vld [vmem:[%s333 + $0x80] sm:$0xf]
        %v468 = vld [vmem:[%s333 + $0x84] sm:$0xf]
        %v469 = vld [vmem:[%s333 + $0x88] sm:$0xf]
        %v470 = vld [vmem:[%s333 + $0x8c] sm:$0xf]
        %v471 = vld [vmem:[%s333 + $0x90] sm:$0xf]
        %v472 = vld [vmem:[%s333 + $0x94] sm:$0xf]
        %v473 = vld [vmem:[%s333 + $0x98] sm:$0xf]
        %v474 = vld [vmem:[%s333 + $0x9c] sm:$0xf]
        %v475 = vld [vmem:[%s333 + $0xa0] sm:$0xf]
        %v476 = vld [vmem:[%s333 + $0xa4] sm:$0xf]
        %v477 = vld [vmem:[%s333 + $0xa8] sm:$0xf]
        %v478 = vld [vmem:[%s333 + $0xac] sm:$0xf]
        %v479 = vld [vmem:[%s333 + $0xb0] sm:$0xf]
        %v480 = vld [vmem:[%s333 + $0xb4] sm:$0xf]
        %v481 = vld [vmem:[%s333 + $0xb8] sm:$0xf]
        %v482 = vld [vmem:[%s333 + $0xbc] sm:$0xf]
        %v483 = vld [vmem:[%s333 + $0xc0] sm:$0xf]
        %v484 = vld [vmem:[%s333 + $0xc4] sm:$0xf]
        %v485 = vld [vmem:[%s333 + $0xc8] sm:$0xf]
        %v486 = vld [vmem:[%s333 + $0xcc] sm:$0xf]
        %v487 = vld [vmem:[%s333 + $0xd0] sm:$0xf]
        %v488 = vld [vmem:[%s333 + $0xd4] sm:$0xf]
        %v489 = vld [vmem:[%s333 + $0xd8] sm:$0xf]
        %v490 = vld [vmem:[%s333 + $0xdc] sm:$0xf]
        %v491 = vld [vmem:[%s333 + $0xe0] sm:$0xf]
        %v492 = vld [vmem:[%s333 + $0xe4] sm:$0xf]
        %v493 = vld [vmem:[%s333 + $0xe8] sm:$0xf]
        %v494 = vld [vmem:[%s333 + $0xec] sm:$0xf]
        %v495 = vld [vmem:[%s333 + $0xf0] sm:$0xf]
        %v496 = vld [vmem:[%s333 + $0xf4] sm:$0xf]
        %v497 = vld [vmem:[%s333 + $0xf8] sm:$0xf]
        %v498 = vld [vmem:[%s333 + $0xfc] sm:$0xf]
        %v507 = vunpack.c.l.b16 %v435
        %v508 = vunpack.c.l.b16 %v436
        %v509 = vunpack.c.l.b16 %v437
        %v510 = vunpack.c.l.b16 %v438
        %v511 = vunpack.c.l.b16 %v439
        %v512 = vunpack.c.l.b16 %v440
        %v513 = vunpack.c.l.b16 %v441
        %v514 = vunpack.c.l.b16 %v442
        %v515 = vpack.c.b16 %v508, %v507
        %v516 = vpack.c.b16 %v510, %v509
        %v517 = vpack.c.b16 %v512, %v511
        %v518 = vpack.c.b16 %v514, %v513
        %vm523 = vcmask 523264
        %v525 = vsel %vm523, %v427, 0
        %527 = vmatprep.subr.bf16.mxu0 0
        %528 = vmatpush1.bf16.msra.mxu0 %v515
        %529 = vmatprep.subr.bf16.mxu0 0
        %530 = vmatpush1.bf16.msra.mxu0 %v516
        %531 = vmatprep.subr.bf16.mxu0 0
        %532 = vmatpush1.bf16.msra.mxu0 %v517
        %533 = vmatprep.subr.bf16.mxu0 0
        %534 = vmatpush1.bf16.msra.mxu0 %v518
        %535 = vmatprep.subr.bf16.mxu0 0
        %536 = vmatpush1.bf16.msra.mxu0 0
        %537 = vmatprep.subr.bf16.mxu0 0
        %538 = vmatpush1.bf16.msra.mxu0 0
        %539 = vmatprep.subr.bf16.mxu0 0
        %540 = vmatpush1.bf16.msra.mxu0 0
        %541 = vmatprep.subr.bf16.mxu0 0
        %542 = vmatpush1.bf16.msra.mxu0 0
        %543 = vmatprep.subr.bf16.mxu0 0
        %544 = vmatpush1.bf16.msra.mxu0 0
        %545 = vmatprep.subr.bf16.mxu0 0
        %546 = vmatpush1.bf16.msra.mxu0 0
        %547 = vmatprep.subr.bf16.mxu0 0
        %548 = vmatpush1.bf16.msra.mxu0 0
        %549 = vmatprep.subr.bf16.mxu0 0
        %550 = vmatpush1.bf16.msra.mxu0 0
        %551 = vmatprep.subr.bf16.mxu0 0
        %552 = vmatpush1.bf16.msra.mxu0 0
        %553 = vmatprep.subr.bf16.mxu0 0
        %554 = vmatpush1.bf16.msra.mxu0 0
        %555 = vmatprep.subr.bf16.mxu0 0
        %556 = vmatpush1.bf16.msra.mxu0 0
        %557 = vmatprep.subr.bf16.mxu0 0
        %558 = vmatpush1.bf16.msra.mxu0 0
        %559 = vmatprep.mubr.bf16.mxu0 0
        %560 = vmatmul.mubr.bf16.gmra.mrb[0].mxu0 %v525
        %v561 = vpop.f32.mrb[0].mxu0
        %v562 = vadd.f32 0.0, %v561
        %v563 = vpop.f32.mrb[0].mxu0
        %v564 = vpop.f32.mrb[0].mxu0
        %v565 = vpop.f32.mrb[0].mxu0
        %566 = vdwg.mxu0
        %v575 = vunpack.c.l.b16 %v443
        %v576 = vunpack.c.l.b16 %v444
        %v577 = vunpack.c.l.b16 %v445
        %v578 = vunpack.c.l.b16 %v446
        %v579 = vunpack.c.l.b16 %v447
        %v580 = vunpack.c.l.b16 %v448
        %v581 = vunpack.c.l.b16 %v449
        %v582 = vunpack.c.l.b16 %v450
        %v583 = vpack.c.b16 %v576, %v575
        %v584 = vpack.c.b16 %v578, %v577
        %v585 = vpack.c.b16 %v580, %v579
        %v586 = vpack.c.b16 %v582, %v581
        %v592 = vsel %vm523, %v428, 0
        %594 = vmatprep.subr.bf16.mxu0 0
        %595 = vmatpush1.bf16.msra.mxu0 %v583
        %596 = vmatprep.subr.bf16.mxu0 0
        %597 = vmatpush1.bf16.msra.mxu0 %v584
        %598 = vmatprep.subr.bf16.mxu0 0
        %599 = vmatpush1.bf16.msra.mxu0 %v585
        %600 = vmatprep.subr.bf16.mxu0 0
        %601 = vmatpush1.bf16.msra.mxu0 %v586
        %602 = vmatprep.subr.bf16.mxu0 0
        %603 = vmatpush1.bf16.msra.mxu0 0
        %604 = vmatprep.subr.bf16.mxu0 0
        %605 = vmatpush1.bf16.msra.mxu0 0
        %606 = vmatprep.subr.bf16.mxu0 0
        %607 = vmatpush1.bf16.msra.mxu0 0
        %608 = vmatprep.subr.bf16.mxu0 0
        %609 = vmatpush1.bf16.msra.mxu0 0
        %610 = vmatprep.subr.bf16.mxu0 0
        %611 = vmatpush1.bf16.msra.mxu0 0
        %612 = vmatprep.subr.bf16.mxu0 0
        %613 = vmatpush1.bf16.msra.mxu0 0
        %614 = vmatprep.subr.bf16.mxu0 0
        %615 = vmatpush1.bf16.msra.mxu0 0
        %616 = vmatprep.subr.bf16.mxu0 0
        %617 = vmatpush1.bf16.msra.mxu0 0
        %618 = vmatprep.subr.bf16.mxu0 0
        %619 = vmatpush1.bf16.msra.mxu0 0
        %620 = vmatprep.subr.bf16.mxu0 0
        %621 = vmatpush1.bf16.msra.mxu0 0
        %622 = vmatprep.subr.bf16.mxu0 0
        %623 = vmatpush1.bf16.msra.mxu0 0
        %624 = vmatprep.subr.bf16.mxu0 0
        %625 = vmatpush1.bf16.msra.mxu0 0
        %626 = vmatprep.mubr.bf16.mxu0 0
        %627 = vmatmul.mubr.bf16.gmra.mrb[0].mxu0 %v592
        %v628 = vpop.f32.mrb[0].mxu0
        %v629 = vadd.f32 0.0, %v628
        %v630 = vpop.f32.mrb[0].mxu0
        %v631 = vpop.f32.mrb[0].mxu0
        %v632 = vpop.f32.mrb[0].mxu0
        %633 = vdwg.mxu0
        %v642 = vunpack.c.l.b16 %v451
        %v643 = vunpack.c.l.b16 %v452
        %v644 = vunpack.c.l.b16 %v453
        %v645 = vunpack.c.l.b16 %v454
        %v646 = vunpack.c.l.b16 %v455
        %v647 = vunpack.c.l.b16 %v456
        %v648 = vunpack.c.l.b16 %v457
        %v649 = vunpack.c.l.b16 %v458
        %v650 = vpack.c.b16 %v643, %v642
        %v651 = vpack.c.b16 %v645, %v644
        %v652 = vpack.c.b16 %v647, %v646
        %v653 = vpack.c.b16 %v649, %v648
        %v659 = vsel %vm523, %v429, 0
        %661 = vmatprep.subr.bf16.mxu0 0
        %662 = vmatpush1.bf16.msra.mxu0 %v650
        %663 = vmatprep.subr.bf16.mxu0 0
        %664 = vmatpush1.bf16.msra.mxu0 %v651
        %665 = vmatprep.subr.bf16.mxu0 0
        %666 = vmatpush1.bf16.msra.mxu0 %v652
        %667 = vmatprep.subr.bf16.mxu0 0
        %668 = vmatpush1.bf16.msra.mxu0 %v653
        %669 = vmatprep.subr.bf16.mxu0 0
        %670 = vmatpush1.bf16.msra.mxu0 0
        %671 = vmatprep.subr.bf16.mxu0 0
        %672 = vmatpush1.bf16.msra.mxu0 0
        %673 = vmatprep.subr.bf16.mxu0 0
        %674 = vmatpush1.bf16.msra.mxu0 0
        %675 = vmatprep.subr.bf16.mxu0 0
        %676 = vmatpush1.bf16.msra.mxu0 0
        %677 = vmatprep.subr.bf16.mxu0 0
        %678 = vmatpush1.bf16.msra.mxu0 0
        %679 = vmatprep.subr.bf16.mxu0 0
        %680 = vmatpush1.bf16.msra.mxu0 0
        %681 = vmatprep.subr.bf16.mxu0 0
        %682 = vmatpush1.bf16.msra.mxu0 0
        %683 = vmatprep.subr.bf16.mxu0 0
        %684 = vmatpush1.bf16.msra.mxu0 0
        %685 = vmatprep.subr.bf16.mxu0 0
        %686 = vmatpush1.bf16.msra.mxu0 0
        %687 = vmatprep.subr.bf16.mxu0 0
        %688 = vmatpush1.bf16.msra.mxu0 0
        %689 = vmatprep.subr.bf16.mxu0 0
        %690 = vmatpush1.bf16.msra.mxu0 0
        %691 = vmatprep.subr.bf16.mxu0 0
        %692 = vmatpush1.bf16.msra.mxu0 0
        %693 = vmatprep.mubr.bf16.mxu0 0
        %694 = vmatmul.mubr.bf16.gmra.mrb[0].mxu0 %v659
        %v695 = vpop.f32.mrb[0].mxu0
        %v696 = vadd.f32 0.0, %v695
        %v697 = vpop.f32.mrb[0].mxu0
        %v698 = vpop.f32.mrb[0].mxu0
        %v699 = vpop.f32.mrb[0].mxu0
        %700 = vdwg.mxu0
        %v709 = vunpack.c.l.b16 %v459
        %v710 = vunpack.c.l.b16 %v460
        %v711 = vunpack.c.l.b16 %v461
        %v712 = vunpack.c.l.b16 %v462
        %v713 = vunpack.c.l.b16 %v463
        %v714 = vunpack.c.l.b16 %v464
        %v715 = vunpack.c.l.b16 %v465
        %v716 = vunpack.c.l.b16 %v466
        %v717 = vpack.c.b16 %v710, %v709
        %v718 = vpack.c.b16 %v712, %v711
        %v719 = vpack.c.b16 %v714, %v713
        %v720 = vpack.c.b16 %v716, %v715
        %v726 = vsel %vm523, %v430, 0
        %728 = vmatprep.subr.bf16.mxu0 0
        %729 = vmatpush1.bf16.msra.mxu0 %v717
        %730 = vmatprep.subr.bf16.mxu0 0
        %731 = vmatpush1.bf16.msra.mxu0 %v718
        %732 = vmatprep.subr.bf16.mxu0 0
        %733 = vmatpush1.bf16.msra.mxu0 %v719
        %734 = vmatprep.subr.bf16.mxu0 0
        %735 = vmatpush1.bf16.msra.mxu0 %v720
        %736 = vmatprep.subr.bf16.mxu0 0
        %737 = vmatpush1.bf16.msra.mxu0 0
        %738 = vmatprep.subr.bf16.mxu0 0
        %739 = vmatpush1.bf16.msra.mxu0 0
        %740 = vmatprep.subr.bf16.mxu0 0
        %741 = vmatpush1.bf16.msra.mxu0 0
        %742 = vmatprep.subr.bf16.mxu0 0
        %743 = vmatpush1.bf16.msra.mxu0 0
        %744 = vmatprep.subr.bf16.mxu0 0
        %745 = vmatpush1.bf16.msra.mxu0 0
        %746 = vmatprep.subr.bf16.mxu0 0
        %747 = vmatpush1.bf16.msra.mxu0 0
        %748 = vmatprep.subr.bf16.mxu0 0
        %749 = vmatpush1.bf16.msra.mxu0 0
        %750 = vmatprep.subr.bf16.mxu0 0
        %751 = vmatpush1.bf16.msra.mxu0 0
        %752 = vmatprep.subr.bf16.mxu0 0
        %753 = vmatpush1.bf16.msra.mxu0 0
        %754 = vmatprep.subr.bf16.mxu0 0
        %755 = vmatpush1.bf16.msra.mxu0 0
        %756 = vmatprep.subr.bf16.mxu0 0
        %757 = vmatpush1.bf16.msra.mxu0 0
        %758 = vmatprep.subr.bf16.mxu0 0
        %759 = vmatpush1.bf16.msra.mxu0 0
        %760 = vmatprep.mubr.bf16.mxu0 0
        %761 = vmatmul.mubr.bf16.gmra.mrb[0].mxu0 %v726
        %v762 = vpop.f32.mrb[0].mxu0
        %v763 = vadd.f32 0.0, %v762
        %v764 = vpop.f32.mrb[0].mxu0
        %v765 = vpop.f32.mrb[0].mxu0
        %v766 = vpop.f32.mrb[0].mxu0
        %767 = vdwg.mxu0
        %v776 = vunpack.c.l.b16 %v467
        %v777 = vunpack.c.l.b16 %v468
        %v778 = vunpack.c.l.b16 %v469
        %v779 = vunpack.c.l.b16 %v470
        %v780 = vunpack.c.l.b16 %v471
        %v781 = vunpack.c.l.b16 %v472
        %v782 = vunpack.c.l.b16 %v473
        %v783 = vunpack.c.l.b16 %v474
        %v784 = vpack.c.b16 %v777, %v776
        %v785 = vpack.c.b16 %v779, %v778
        %v786 = vpack.c.b16 %v781, %v780
        %v787 = vpack.c.b16 %v783, %v782
        %v793 = vsel %vm523, %v431, 0
        %795 = vmatprep.subr.bf16.mxu0 0
        %796 = vmatpush1.bf16.msra.mxu0 %v784
        %797 = vmatprep.subr.bf16.mxu0 0
        %798 = vmatpush1.bf16.msra.mxu0 %v785
        %799 = vmatprep.subr.bf16.mxu0 0
        %800 = vmatpush1.bf16.msra.mxu0 %v786
        %801 = vmatprep.subr.bf16.mxu0 0
        %802 = vmatpush1.bf16.msra.mxu0 %v787
        %803 = vmatprep.subr.bf16.mxu0 0
        %804 = vmatpush1.bf16.msra.mxu0 0
        %805 = vmatprep.subr.bf16.mxu0 0
        %806 = vmatpush1.bf16.msra.mxu0 0
        %807 = vmatprep.subr.bf16.mxu0 0
        %808 = vmatpush1.bf16.msra.mxu0 0
        %809 = vmatprep.subr.bf16.mxu0 0
        %810 = vmatpush1.bf16.msra.mxu0 0
        %811 = vmatprep.subr.bf16.mxu0 0
        %812 = vmatpush1.bf16.msra.mxu0 0
        %813 = vmatprep.subr.bf16.mxu0 0
        %814 = vmatpush1.bf16.msra.mxu0 0
        %815 = vmatprep.subr.bf16.mxu0 0
        %816 = vmatpush1.bf16.msra.mxu0 0
        %817 = vmatprep.subr.bf16.mxu0 0
        %818 = vmatpush1.bf16.msra.mxu0 0
        %819 = vmatprep.subr.bf16.mxu0 0
        %820 = vmatpush1.bf16.msra.mxu0 0
        %821 = vmatprep.subr.bf16.mxu0 0
        %822 = vmatpush1.bf16.msra.mxu0 0
        %823 = vmatprep.subr.bf16.mxu0 0
        %824 = vmatpush1.bf16.msra.mxu0 0
        %825 = vmatprep.subr.bf16.mxu0 0
        %826 = vmatpush1.bf16.msra.mxu0 0
        %827 = vmatprep.mubr.bf16.mxu0 0
        %828 = vmatmul.mubr.bf16.gmra.mrb[0].mxu0 %v793
        %v829 = vpop.f32.mrb[0].mxu0
        %v830 = vadd.f32 0.0, %v829
        %v831 = vpop.f32.mrb[0].mxu0
        %v832 = vpop.f32.mrb[0].mxu0
        %v833 = vpop.f32.mrb[0].mxu0
        %834 = vdwg.mxu0
        %v843 = vunpack.c.l.b16 %v475
        %v844 = vunpack.c.l.b16 %v476
        %v845 = vunpack.c.l.b16 %v477
        %v846 = vunpack.c.l.b16 %v478
        %v847 = vunpack.c.l.b16 %v479
        %v848 = vunpack.c.l.b16 %v480
        %v849 = vunpack.c.l.b16 %v481
        %v850 = vunpack.c.l.b16 %v482
        %v851 = vpack.c.b16 %v844, %v843
        %v852 = vpack.c.b16 %v846, %v845
        %v853 = vpack.c.b16 %v848, %v847
        %v854 = vpack.c.b16 %v850, %v849
        %v860 = vsel %vm523, %v432, 0
        %862 = vmatprep.subr.bf16.mxu0 0
        %863 = vmatpush1.bf16.msra.mxu0 %v851
        %864 = vmatprep.subr.bf16.mxu0 0
        %865 = vmatpush1.bf16.msra.mxu0 %v852
        %866 = vmatprep.subr.bf16.mxu0 0
        %867 = vmatpush1.bf16.msra.mxu0 %v853
        %868 = vmatprep.subr.bf16.mxu0 0
        %869 = vmatpush1.bf16.msra.mxu0 %v854
        %870 = vmatprep.subr.bf16.mxu0 0
        %871 = vmatpush1.bf16.msra.mxu0 0
        %872 = vmatprep.subr.bf16.mxu0 0
        %873 = vmatpush1.bf16.msra.mxu0 0
        %874 = vmatprep.subr.bf16.mxu0 0
        %875 = vmatpush1.bf16.msra.mxu0 0
        %876 = vmatprep.subr.bf16.mxu0 0
        %877 = vmatpush1.bf16.msra.mxu0 0
        %878 = vmatprep.subr.bf16.mxu0 0
        %879 = vmatpush1.bf16.msra.mxu0 0
        %880 = vmatprep.subr.bf16.mxu0 0
        %881 = vmatpush1.bf16.msra.mxu0 0
        %882 = vmatprep.subr.bf16.mxu0 0
        %883 = vmatpush1.bf16.msra.mxu0 0
        %884 = vmatprep.subr.bf16.mxu0 0
        %885 = vmatpush1.bf16.msra.mxu0 0
        %886 = vmatprep.subr.bf16.mxu0 0
        %887 = vmatpush1.bf16.msra.mxu0 0
        %888 = vmatprep.subr.bf16.mxu0 0
        %889 = vmatpush1.bf16.msra.mxu0 0
        %890 = vmatprep.subr.bf16.mxu0 0
        %891 = vmatpush1.bf16.msra.mxu0 0
        %892 = vmatprep.subr.bf16.mxu0 0
        %893 = vmatpush1.bf16.msra.mxu0 0
        %894 = vmatprep.mubr.bf16.mxu0 0
        %895 = vmatmul.mubr.bf16.gmra.mrb[0].mxu0 %v860
        %v896 = vpop.f32.mrb[0].mxu0
        %v897 = vadd.f32 0.0, %v896
        %v898 = vpop.f32.mrb[0].mxu0
        %v899 = vpop.f32.mrb[0].mxu0
        %v900 = vpop.f32.mrb[0].mxu0
        %901 = vdwg.mxu0
        %v910 = vunpack.c.l.b16 %v483
        %v911 = vunpack.c.l.b16 %v484
        %v912 = vunpack.c.l.b16 %v485
        %v913 = vunpack.c.l.b16 %v486
        %v914 = vunpack.c.l.b16 %v487
        %v915 = vunpack.c.l.b16 %v488
        %v916 = vunpack.c.l.b16 %v489
        %v917 = vunpack.c.l.b16 %v490
        %v918 = vpack.c.b16 %v911, %v910
        %v919 = vpack.c.b16 %v913, %v912
        %v920 = vpack.c.b16 %v915, %v914
        %v921 = vpack.c.b16 %v917, %v916
        %v927 = vsel %vm523, %v433, 0
        %929 = vmatprep.subr.bf16.mxu0 0
        %930 = vmatpush1.bf16.msra.mxu0 %v918
        %931 = vmatprep.subr.bf16.mxu0 0
        %932 = vmatpush1.bf16.msra.mxu0 %v919
        %933 = vmatprep.subr.bf16.mxu0 0
        %934 = vmatpush1.bf16.msra.mxu0 %v920
        %935 = vmatprep.subr.bf16.mxu0 0
        %936 = vmatpush1.bf16.msra.mxu0 %v921
        %937 = vmatprep.subr.bf16.mxu0 0
        %938 = vmatpush1.bf16.msra.mxu0 0
        %939 = vmatprep.subr.bf16.mxu0 0
        %940 = vmatpush1.bf16.msra.mxu0 0
        %941 = vmatprep.subr.bf16.mxu0 0
        %942 = vmatpush1.bf16.msra.mxu0 0
        %943 = vmatprep.subr.bf16.mxu0 0
        %944 = vmatpush1.bf16.msra.mxu0 0
        %945 = vmatprep.subr.bf16.mxu0 0
        %946 = vmatpush1.bf16.msra.mxu0 0
        %947 = vmatprep.subr.bf16.mxu0 0
        %948 = vmatpush1.bf16.msra.mxu0 0
        %949 = vmatprep.subr.bf16.mxu0 0
        %950 = vmatpush1.bf16.msra.mxu0 0
        %951 = vmatprep.subr.bf16.mxu0 0
        %952 = vmatpush1.bf16.msra.mxu0 0
        %953 = vmatprep.subr.bf16.mxu0 0
        %954 = vmatpush1.bf16.msra.mxu0 0
        %955 = vmatprep.subr.bf16.mxu0 0
        %956 = vmatpush1.bf16.msra.mxu0 0
        %957 = vmatprep.subr.bf16.mxu0 0
        %958 = vmatpush1.bf16.msra.mxu0 0
        %959 = vmatprep.subr.bf16.mxu0 0
        %960 = vmatpush1.bf16.msra.mxu0 0
        %961 = vmatprep.mubr.bf16.mxu0 0
        %962 = vmatmul.mubr.bf16.gmra.mrb[0].mxu0 %v927
        %v963 = vpop.f32.mrb[0].mxu0
        %v964 = vadd.f32 0.0, %v963
        %v965 = vpop.f32.mrb[0].mxu0
        %v966 = vpop.f32.mrb[0].mxu0
        %v967 = vpop.f32.mrb[0].mxu0
        %968 = vdwg.mxu0
        %v977 = vunpack.c.l.b16 %v491
        %v978 = vunpack.c.l.b16 %v492
        %v979 = vunpack.c.l.b16 %v493
        %v980 = vunpack.c.l.b16 %v494
        %v981 = vunpack.c.l.b16 %v495
        %v982 = vunpack.c.l.b16 %v496
        %v983 = vunpack.c.l.b16 %v497
        %v984 = vunpack.c.l.b16 %v498
        %v985 = vpack.c.b16 %v978, %v977
        %v986 = vpack.c.b16 %v980, %v979
        %v987 = vpack.c.b16 %v982, %v981
        %v988 = vpack.c.b16 %v984, %v983
        %v994 = vsel %vm523, %v434, 0
        %996 = vmatprep.subr.bf16.mxu0 0
        %997 = vmatpush1.bf16.msra.mxu0 %v985
        %998 = vmatprep.subr.bf16.mxu0 0
        %999 = vmatpush1.bf16.msra.mxu0 %v986
        %1000 = vmatprep.subr.bf16.mxu0 0
        %1001 = vmatpush1.bf16.msra.mxu0 %v987
        %1002 = vmatprep.subr.bf16.mxu0 0
        %1003 = vmatpush1.bf16.msra.mxu0 %v988
        %1004 = vmatprep.subr.bf16.mxu0 0
        %1005 = vmatpush1.bf16.msra.mxu0 0
        %1006 = vmatprep.subr.bf16.mxu0 0
        %1007 = vmatpush1.bf16.msra.mxu0 0
        %1008 = vmatprep.subr.bf16.mxu0 0
        %1009 = vmatpush1.bf16.msra.mxu0 0
        %1010 = vmatprep.subr.bf16.mxu0 0
        %1011 = vmatpush1.bf16.msra.mxu0 0
        %1012 = vmatprep.subr.bf16.mxu0 0
        %1013 = vmatpush1.bf16.msra.mxu0 0
        %1014 = vmatprep.subr.bf16.mxu0 0
        %1015 = vmatpush1.bf16.msra.mxu0 0
        %1016 = vmatprep.subr.bf16.mxu0 0
        %1017 = vmatpush1.bf16.msra.mxu0 0
        %1018 = vmatprep.subr.bf16.mxu0 0
        %1019 = vmatpush1.bf16.msra.mxu0 0
        %1020 = vmatprep.subr.bf16.mxu0 0
        %1021 = vmatpush1.bf16.msra.mxu0 0
        %1022 = vmatprep.subr.bf16.mxu0 0
        %1023 = vmatpush1.bf16.msra.mxu0 0
        %1024 = vmatprep.subr.bf16.mxu0 0
        %1025 = vmatpush1.bf16.msra.mxu0 0
        %1026 = vmatprep.subr.bf16.mxu0 0
        %1027 = vmatpush1.bf16.msra.mxu0 0
        %1028 = vmatprep.mubr.bf16.mxu0 0
        %1029 = vmatmul.mubr.bf16.gmra.mrb[0].mxu0 %v994
        %v1030 = vpop.f32.mrb[0].mxu0
        %v1031 = vadd.f32 0.0, %v1030
        %v1032 = vpop.f32.mrb[0].mxu0
        %v1033 = vpop.f32.mrb[0].mxu0
        %v1034 = vpop.f32.mrb[0].mxu0
        %1035 = vdwg.mxu0
        %v1036 = vadd.f32 %v419, %v562
        %v1037 = vadd.f32 %v420, %v629
        %v1038 = vadd.f32 %v421, %v696
        %v1039 = vadd.f32 %v422, %v763
        %v1040 = vadd.f32 %v423, %v830
        %v1041 = vadd.f32 %v424, %v897
        %v1042 = vadd.f32 %v425, %v964
        %v1043 = vadd.f32 %v426, %v1031
        %1044 = vst [vmem:[#allocation2] sm:$0x1] %v1036
        %1045 = vst [vmem:[#allocation2 + $0x1] sm:$0x1] %v1037
        %1046 = vst [vmem:[#allocation2 + $0x2] sm:$0x1] %v1038
        %1047 = vst [vmem:[#allocation2 + $0x3] sm:$0x1] %v1039
        %1048 = vst [vmem:[#allocation2 + $0x4] sm:$0x1] %v1040
        %1049 = vst [vmem:[#allocation2 + $0x5] sm:$0x1] %v1041
        %1050 = vst [vmem:[#allocation2 + $0x6] sm:$0x1] %v1042
        %1051 = vst [vmem:[#allocation2 + $0x7] sm:$0x1] %v1043
        // Predicated region
        $region57: #{tpu_custom_call.1} parent=43 // pred_check
          %p1052 = pneg %p407
        $region58: #{tpu_custom_call.1} parent=43 // pred_check_branch
          %1054 = sbr.rel (%p1052) target = $region60
        $region59: #{tpu_custom_call.1} parent=43 // pred_region
          %v1055 = vld [vmem:[%s401] sm:$0xff]
          %v1056 = vrcp.pop %v1055
          %v1057 = vmul.f32 1.0, %v1056
          %v1058 = vld [vmem:[#allocation2] sm:$0x1]
          %v1059 = vld [vmem:[#allocation2 + $0x1] sm:$0x1]
          %v1060 = vld [vmem:[#allocation2 + $0x2] sm:$0x1]
          %v1061 = vld [vmem:[#allocation2 + $0x3] sm:$0x1]
          %v1062 = vld [vmem:[#allocation2 + $0x4] sm:$0x1]
          %v1063 = vld [vmem:[#allocation2 + $0x5] sm:$0x1]
          %v1064 = vld [vmem:[#allocation2 + $0x6] sm:$0x1]
          %v1065 = vld [vmem:[#allocation2 + $0x7] sm:$0x1]
          %1067 = vset.pattern.permute.xlu0 0
          %1068 = vperm.xlu0 %1067, %v1057
          %v1069 = vpop.permute.xlu0 %1068
          %v1070 = vlaneseq
          %v1071 = vshrl.u32 %v1070, 7
          %v1072 = vsub.s32 0, %v1071
          %v1073 = vrot.slane %v1069, %v1072
          %v1074 = vlaneseq
          %v1075 = vshrl.u32 %v1074, 7
          %v1076 = vsub.s32 1, %v1075
          %v1077 = vrot.slane %v1069, %v1076
          %v1078 = vlaneseq
          %v1079 = vshrl.u32 %v1078, 7
          %v1080 = vsub.s32 2, %v1079
          %v1081 = vrot.slane %v1069, %v1080
          %v1082 = vlaneseq
          %v1083 = vshrl.u32 %v1082, 7
          %v1084 = vsub.s32 3, %v1083
          %v1085 = vrot.slane %v1069, %v1084
          %v1086 = vlaneseq
          %v1087 = vshrl.u32 %v1086, 7
          %v1088 = vsub.s32 4, %v1087
          %v1089 = vrot.slane %v1069, %v1088
          %v1090 = vlaneseq
          %v1091 = vshrl.u32 %v1090, 7
          %v1092 = vsub.s32 5, %v1091
          %v1093 = vrot.slane %v1069, %v1092
          %v1094 = vlaneseq
          %v1095 = vshrl.u32 %v1094, 7
          %v1096 = vsub.s32 6, %v1095
          %v1097 = vrot.slane %v1069, %v1096
          %v1098 = vlaneseq
          %v1099 = vshrl.u32 %v1098, 7
          %v1100 = vsub.s32 7, %v1099
          %v1101 = vrot.slane %v1069, %v1100
          %v1110 = vmul.f32 %v1058, %v1073
          %v1111 = vmul.f32 %v1059, %v1077
          %v1112 = vmul.f32 %v1060, %v1081
          %v1113 = vmul.f32 %v1061, %v1085
          %v1114 = vmul.f32 %v1062, %v1089
          %v1115 = vmul.f32 %v1063, %v1093
          %v1116 = vmul.f32 %v1064, %v1097
          %v1117 = vmul.f32 %v1065, %v1101
          %v1118 = vld [vmem:[#allocation6] sm:$0xff]
          %v1119 = vld [vmem:[#allocation6 + $0x8] sm:$0xff]
          %v1120 = vld [vmem:[#allocation6 + $0x10] sm:$0xff]
          %v1121 = vld [vmem:[#allocation6 + $0x18] sm:$0xff]
          %v1122 = vld [vmem:[#allocation6 + $0x20] sm:$0xff]
          %v1123 = vld [vmem:[#allocation6 + $0x28] sm:$0xff]
          %v1124 = vld [vmem:[#allocation6 + $0x30] sm:$0xff]
          %v1125 = vld [vmem:[#allocation6 + $0x38] sm:$0xff]
          %v1126 = vld [vmem:[#allocation6 + $0x40] sm:$0xff]
          %v1127 = vld [vmem:[#allocation6 + $0x48] sm:$0xff]
          %v1128 = vld [vmem:[#allocation6 + $0x50] sm:$0xff]
          %v1129 = vld [vmem:[#allocation6 + $0x58] sm:$0xff]
          %v1130 = vld [vmem:[#allocation6 + $0x60] sm:$0xff]
          %v1131 = vld [vmem:[#allocation6 + $0x68] sm:$0xff]
          %v1132 = vld [vmem:[#allocation6 + $0x70] sm:$0xff]
          %v1133 = vld [vmem:[#allocation6 + $0x78] sm:$0xff]
          %v1134 = vld [vmem:[%s4] sm:$0x1]
          %v1136 = vlaneseq
          %v1137 = vshrl.u32 %v1136, 7
          %v1138 = vsub.s32 0, %v1137
          %v1139 = vrot.slane %v1134, %v1138
          %v1149 = vcombine.low %v1110, %v1111
          %v1150 = vcombine.low %v1112, %v1113
          %v1151 = vcombine.low %v1114, %v1115
          %v1152 = vcombine.low %v1116, %v1117
          %v1154 = vunpack.c.l.s4 1966171168
          %v1155 = vunpack.c.0.s8 %v1154
          %v1156 = vlaneseq
          %v1157 = vshrl.u32 %v1156, 7
          %v1158 = vsub.s32 %v1155, %v1157
          %v1159 = vrot.slane %v1149, %v1158
          %v1161 = vunpack.c.l.s4 1966171168
          %v1162 = vunpack.c.0.s8 %v1161
          %v1163 = vlaneseq
          %v1164 = vshrl.u32 %v1163, 7
          %v1165 = vsub.s32 %v1162, %v1164
          %v1166 = vrot.slane %v1150, %v1165
          %v1168 = vunpack.c.l.s4 1966171168
          %v1169 = vunpack.c.0.s8 %v1168
          %v1170 = vlaneseq
          %v1171 = vshrl.u32 %v1170, 7
          %v1172 = vsub.s32 %v1169, %v1171
          %v1173 = vrot.slane %v1151, %v1172
          %v1175 = vunpack.c.l.s4 1966171168
          %v1176 = vunpack.c.0.s8 %v1175
          %v1177 = vlaneseq
          %v1178 = vshrl.u32 %v1177, 7
          %v1179 = vsub.s32 %v1176, %v1178
          %v1180 = vrot.slane %v1152, %v1179
          %v1181 = vcombine.low %v1159, %v1166
          %v1182 = vcombine.low %v1173, %v1180
          %v1184 = vunpack.c.l.s4 1966171168
          %v1185 = vunpack.c.0.s8 %v1184
          %v1186 = vlaneseq
          %v1187 = vshrl.u32 %v1186, 7
          %v1188 = vsub.s32 %v1185, %v1187
          %v1189 = vrot.slane %v1181, %v1188
          %v1191 = vunpack.c.l.s4 1966171168
          %v1192 = vunpack.c.0.s8 %v1191
          %v1193 = vlaneseq
          %v1194 = vshrl.u32 %v1193, 7
          %v1195 = vsub.s32 %v1192, %v1194
          %v1196 = vrot.slane %v1182, %v1195
          %v1197 = vcombine.low %v1189, %v1196
          %1199 = vmatprep.subr.mxu0 0.0
          %1200 = vmatpush1.msra.mxu0 %v1118
          %1201 = vmatprep.subr.mxu0 0.0
          %1202 = vmatpush1.msra.mxu0 %v1119
          %1203 = vmatprep.subr.mxu0 0.0
          %1204 = vmatpush1.msra.mxu0 %v1120
          %1205 = vmatprep.subr.mxu0 0.0
          %1206 = vmatpush1.msra.mxu0 %v1121
          %1207 = vmatprep.subr.mxu0 0.0
          %1208 = vmatpush1.msra.mxu0 %v1122
          %1209 = vmatprep.subr.mxu0 0.0
          %1210 = vmatpush1.msra.mxu0 %v1123
          %1211 = vmatprep.subr.mxu0 0.0
          %1212 = vmatpush1.msra.mxu0 %v1124
          %1213 = vmatprep.subr.mxu0 0.0
          %1214 = vmatpush1.msra.mxu0 %v1125
          %1215 = vmatprep.subr.mxu0 0.0
          %1216 = vmatpush1.msra.mxu0 %v1126
          %1217 = vmatprep.subr.mxu0 0.0
          %1218 = vmatpush1.msra.mxu0 %v1127
          %1219 = vmatprep.subr.mxu0 0.0
          %1220 = vmatpush1.msra.mxu0 %v1128
          %1221 = vmatprep.subr.mxu0 0.0
          %1222 = vmatpush1.msra.mxu0 %v1129
          %1223 = vmatprep.subr.mxu0 0.0
          %1224 = vmatpush1.msra.mxu0 %v1130
          %1225 = vmatprep.subr.mxu0 0.0
          %1226 = vmatpush1.msra.mxu0 %v1131
          %1227 = vmatprep.subr.mxu0 0.0
          %1228 = vmatpush1.msra.mxu0 %v1132
          %1229 = vmatprep.subr.mxu0 0.0
          %1230 = vmatpush1.msra.mxu0 %v1133
          %1231 = vmatprep.subr.mxu0 0.0
          %1232 = vmatpush1.msra.mxu0 0.0
          %1233 = vmatprep.subr.mxu0 0.0
          %1234 = vmatpush1.msra.mxu0 0.0
          %1235 = vmatprep.subr.mxu0 0.0
          %1236 = vmatpush1.msra.mxu0 0.0
          %1237 = vmatprep.subr.mxu0 0.0
          %1238 = vmatpush1.msra.mxu0 0.0
          %1239 = vmatprep.subr.mxu0 0.0
          %1240 = vmatpush1.msra.mxu0 0.0
          %1241 = vmatprep.subr.mxu0 0.0
          %1242 = vmatpush1.msra.mxu0 0.0
          %1243 = vmatprep.subr.mxu0 0.0
          %1244 = vmatpush1.msra.mxu0 0.0
          %1245 = vmatprep.subr.mxu0 0.0
          %1246 = vmatpush1.msra.mxu0 0.0
          %1247 = vmatprep.subr.mxu0 0.0
          %1248 = vmatpush1.msra.mxu0 0.0
          %1249 = vmatprep.subr.mxu0 0.0
          %1250 = vmatpush1.msra.mxu0 0.0
          %1251 = vmatprep.subr.mxu0 0.0
          %1252 = vmatpush1.msra.mxu0 0.0
          %1253 = vmatprep.subr.mxu0 0.0
          %1254 = vmatpush1.msra.mxu0 0.0
          %1255 = vmatprep.subr.mxu0 0.0
          %1256 = vmatpush1.msra.mxu0 0.0
          %1257 = vmatprep.subr.mxu0 0.0
          %1258 = vmatpush1.msra.mxu0 0.0
          %1259 = vmatprep.subr.mxu0 0.0
          %1260 = vmatpush1.msra.mxu0 0.0
          %1261 = vmatprep.subr.mxu0 0.0
          %1262 = vmatpush1.msra.mxu0 0.0
          %1263 = vmatprep.mubr.f32.mxu0 0.0
          %1264 = vmatmul.mubr.f32.gmra.mrb[0].mxu0 %v1197
          %v1265 = vpop.f32.mrb[0].mxu0
          %v1266 = vadd.f32 %v1139, %v1265
          %v1267 = vpop.f32.mrb[0].mxu0
          %1268 = vdwg.mxu0
          %1269 = vst [vmem:[%s380] sm:$0xff] %v1266
          %v1270 = vld [vmem:[%s405] sm:$0xff]
          %v1271 = vsub.f32 %v1266, %v1270
          %v1272 = vmul.f32 %v1271, %v1271
          %1273 = vadd.xlane.f32.xlu0 %v1272
          %v1274 = vpop.xlane.xlu0 %1273
          %1275 = vst [vmem:[%s387] sm:$0xff] %v1274
        $region60: #{tpu_custom_call.1} parent=43 // pred_fallthru
          _
        %s1276 = sand.u32 %s199, 1
        %s1277 = scalar_lea.sflag [#allocation5], %s1276
        %s1278 = sand.u32 %s199, 1
        %s1279 = smul.addr %s1278, 8
        %s1280 = scalar_lea.vmem [#allocation8], %s1279
        %s1281 = sand.u32 %s225, 1
        %s1282 = scalar_lea.sflag [#allocation10], %s1281
        %s1283 = sand.u32 %s225, 1
        %s1284 = smul.addr %s1283, 8
        %s1285 = scalar_lea.vmem [#allocation9], %s1284
        // Predicated region
        $region61: #{tpu_custom_call.1} parent=43 // pred_check
          %p1286 = pneg %p209
        $region62: #{tpu_custom_call.1} parent=43 // pred_check_branch
          %1288 = sbr.rel (%p1286) target = $region64
        $region63: #{tpu_custom_call.1} parent=43 // pred_region
          %s1290 = ssub.s32 128, 128
          %1291 = vsyncadd %s1277, %s1290
          %s1292 = smul.addr %s33, 128
          %s1293 = scalar_lea.hbm %s6, %s1292
          %s1295 = sshll.u32 %s1280, 4
          %s1296 = int_to_ptr.vmem [resolvable:$true] %s1295
          %1298 = dma.vmem_to_hbm [thread:$0]  %s1296, 128, %s1293, %s1277
        $region64: #{tpu_custom_call.1} parent=43 // pred_fallthru
          _
        // Predicated region
        $region65: #{tpu_custom_call.1} parent=43 // pred_check
          %p1299 = pneg %p235
        $region66: #{tpu_custom_call.1} parent=43 // pred_check_branch
          %1301 = sbr.rel (%p1299) target = $region68
        $region67: #{tpu_custom_call.1} parent=43 // pred_region
          %s1303 = ssub.s32 128, 128
          %1304 = vsyncadd %s1282, %s1303
          %s1305 = smul.addr %s33, 128
          %s1306 = scalar_lea.hbm %s7, %s1305
          %s1308 = sshll.u32 %s1285, 4
          %s1309 = int_to_ptr.vmem [resolvable:$true] %s1308
          %1311 = dma.vmem_to_hbm [thread:$0]  %s1309, 128, %s1306, %s1282
        $region68: #{tpu_custom_call.1} parent=43 // pred_fallthru
          _
      $region44: #{tpu_custom_call.1} parent=5 // pred_fallthru
        _
      %p1312 = scmp.le.s32.totalorder 2, %s24
      // Predicated region
      $region69: #{tpu_custom_call.1} parent=5 // pred_check
        %p1313 = pneg %p1312
      $region70: #{tpu_custom_call.1} parent=5 // pred_check_branch
        %1315 = sbr.rel (%p1313) target = $region72
      $region71: #{tpu_custom_call.1} parent=5 // pred_region
        %s1316 = ssub.s32 %s24, 2
        // Predicated region
        $region73: #{tpu_custom_call.1} parent=71 // pred_check
          %p1317 = pneg %p215
        $region74: #{tpu_custom_call.1} parent=71 // pred_check_branch
          %1319 = sbr.rel (%p1317) target = $region76
        $region75: #{tpu_custom_call.1} parent=71 // pred_region
          %s1320 = sand.u32 %s200, 1
          %s1321 = scalar_lea.sflag [#allocation5], %s1320
          %s1322 = sand.u32 %s200, 1
          %s1323 = smul.addr %s1322, 8
          %s1324 = scalar_lea.vmem [#allocation8], %s1323
          %1325 = dma.done %s1321, 128
        $region76: #{tpu_custom_call.1} parent=71 // pred_fallthru
          _
        // Predicated region
        $region77: #{tpu_custom_call.1} parent=71 // pred_check
          %p1326 = pneg %p241
        $region78: #{tpu_custom_call.1} parent=71 // pred_check_branch
          %1328 = sbr.rel (%p1326) target = $region80
        $region79: #{tpu_custom_call.1} parent=71 // pred_region
          %s1329 = sand.u32 %s226, 1
          %s1330 = scalar_lea.sflag [#allocation10], %s1329
          %s1331 = sand.u32 %s226, 1
          %s1332 = smul.addr %s1331, 8
          %s1333 = scalar_lea.vmem [#allocation9], %s1332
          %1334 = dma.done %s1330, 128
        $region80: #{tpu_custom_call.1} parent=71 // pred_fallthru
          _
      $region72: #{tpu_custom_call.1} parent=5 // pred_fallthru
        _
    $region6: #{tpu_custom_call.1} parent=1 // loop_footer
      %s28 = sadd.s32 1, %s24
    $region7: #{tpu_custom_call.1} parent=1 // loop_footer_branch
      %23 = sbr.rel target = $region3
    $region8: #{tpu_custom_call.1} parent=1 // loop_exit
      _
    %1335 = vsyncpa [#allocation4], 1
    %s1336 = scalar_lea.sflag [#allocation4], 1
    %1337 = vsyncpa %s1336, 1
    %1338 = vsyncpa [#allocation7], 1
    %1339 = vsyncpa [#allocation5], 1
    %s1340 = scalar_lea.sflag [#allocation5], 1
    %1341 = vsyncpa %s1340, 1
    %1342 = vsyncpa [#allocation10], 1
    %s1343 = scalar_lea.sflag [#allocation10], 1
    %1344 = vsyncpa %s1343, 1

</llo_original>
